<compile_context>
chip_gen: v7x
topology: tpu7x:2x2x1
jax: 0.10.0
libtpu: 0.0.40
codegen_flags: <defaults>
</compile_context>

<pallas_src>
import jax
import jax.numpy as jnp
from jax.experimental import pallas as pl
from jax.experimental.pallas import tpu as pltpu


def _attention_fusion_kernel(x1_ref, x2_ref, w1_ref, b1_ref, w2_ref, b2_ref,
                             out_ref):
    # Streamed activations in native dtype; concat fused in-registers.
    x1 = x1_ref[...]                                    # (tb, D1)
    x2 = x2_ref[...]                                    # (tb, D2)
    combined = jnp.concatenate([x1, x2], axis=-1)       # (tb, D) native dtype

    # fc1 + ReLU: one K=D matmul on the MXU with f32 accumulation.
    h = (jnp.dot(combined, w1_ref[...], preferred_element_type=jnp.float32)
         + b1_ref[...].astype(jnp.float32))
    h = jnp.maximum(h, 0.0)

    # fc2 -> (tb, 1) scores.  N=1 matmul wastes the MXU, so do it as a VPU
    # broadcast multiply + XLU lane reduction (both slots otherwise idle here).
    s = (jnp.sum(h * w2_ref[...].astype(jnp.float32), axis=-1, keepdims=True)
         + b2_ref[0])

    # softmax over dim=1 (singleton axis) — identically 1.0 per row; kept for
    # exact fidelity to the PyTorch graph (a handful of VPU/EUP ops on a
    # (tb, 1) column).  Do NOT use approx reciprocal here.
    m = jnp.max(s, axis=1, keepdims=True)
    e = jnp.exp(s - m)
    attn = e * pl.reciprocal(jnp.sum(e, axis=1, keepdims=True), approx=False)

    # Single full-width, lane-dense store: multiply in f32, cast once.
    out_ref[...] = (attn * combined.astype(jnp.float32)).astype(out_ref.dtype)


def _pick_block_rows(batch, d_total, hidden, itemsize,
                     vmem_budget_bytes=20 * 1024 * 1024, max_rows=2048,
                     buffers=3):
    """Largest multiple-of-16 row tile whose buffered in/out streams plus the
    resident weights fit a conservative VMEM budget (safe on v5e/v6e/v7x once
    the scoped limit is raised to 32 MiB via CompilerParams)."""
    weight_bytes = (d_total * hidden + 2 * hidden) * itemsize
    per_row = (buffers * 2 * d_total * itemsize   # buffered x1+x2 in / out streams
               + hidden * 4                       # f32 (tb, H) hidden activation
               + d_total * 4)                     # f32 combined staging
    avail = max(vmem_budget_bytes - weight_bytes, 16 * per_row)
    rows = max(16, min(max_rows, avail // per_row) // 16 * 16)
    return int(rows)


def prepare_params(w1, b1, w2, b2):
    """One-time conversion of PyTorch-layout params (w1:(H,D), b1:(H,),
    w2:(1,H), b2:(1,)) to kernel layout.  Hoisted out of the per-call path."""
    H = w1.shape[0]
    return (jnp.asarray(w1).T,                              # (D, H) input-major
            jnp.asarray(b1).reshape(1, H),                  # (1, H)
            jnp.asarray(w2).reshape(1, H),                  # (1, H)
            jnp.asarray(b2).reshape(1).astype(jnp.float32))  # (1,) -> SMEM


def attention_fusion_forward(x1, x2, w1t, b1_2d, w2_row, b2_1d, *, block_b=None):
    """x1: (B, D1), x2: (B, D2); params from prepare_params().
    Returns softmax(fc2(relu(fc1(cat(x1, x2)))), dim=1) * cat(x1, x2)."""
    B, D1 = x1.shape
    _, D2 = x2.shape
    D = D1 + D2
    H = w1t.shape[1]
    assert w1t.shape[0] == D
    out_dtype = jnp.result_type(x1.dtype, x2.dtype)
    itemsize = jnp.dtype(out_dtype).itemsize

    # Batch-tile selection: biggest VMEM-budgeted multiple-of-16 tile (cap 2048),
    # but force >=2 grid steps for large batches so both v7x TensorCores work.
    if block_b is not None:
        tb = int(block_b)
    else:
        tb = _pick_block_rows(B, D, H, itemsize)
        if B > 256:
            half_b = ((B + 1) // 2 + 15) // 16 * 16
            tb = min(tb, half_b)
    if tb >= B:
        tb = B                                   # full-extent block is always legal
    else:
        tb = max(16, (tb // 16) * 16)            # sublane-tiling safe for f32/bf16
    n_steps = pl.cdiv(B, tb)
    grid = (n_steps,)

    # 3-deep buffering on the streamed operands when there is an actual pipeline:
    # per-step compute is tiny, so deeper buffering hides DMA issue/turnaround.
    if n_steps > 1:
        def stream(shape):
            return pl.BlockSpec(shape, lambda i: (i, 0),
                                pipeline_mode=pl.Buffered(3))
    else:
        def stream(shape):
            return pl.BlockSpec(shape, lambda i: (i, 0))

    return pl.pallas_call(
        _attention_fusion_kernel,
        out_shape=jax.ShapeDtypeStruct((B, D), out_dtype),
        grid_spec=pltpu.PrefetchScalarGridSpec(
            num_scalar_prefetch=0,
            grid=grid,
            in_specs=[
                stream((tb, D1)),                                   # x1 tile (streamed)
                stream((tb, D2)),                                   # x2 tile (streamed)
                pl.BlockSpec((D, H), lambda i: (0, 0)),             # fc1 weight (stacked, resident)
                pl.BlockSpec((1, H), lambda i: (0, 0)),             # fc1 bias
                pl.BlockSpec((1, H), lambda i: (0, 0)),             # fc2 weight row
                pl.BlockSpec(memory_space=pltpu.MemorySpace.SMEM),  # fc2 bias (scalar)
            ],
            out_specs=stream((tb, D)),
        ),
        compiler_params=pltpu.CompilerParams(
            dimension_semantics=("parallel",),        # batch tiles shard across TCs
            vmem_limit_bytes=32 * 1024 * 1024,        # match the larger tile budget
        ),
    )(x1, x2, w1t, b1_2d, w2_row, b2_1d)


def init_params(key, input_dim, hidden_dim, dtype=jnp.float32):
    """Deterministic init mirroring nn.Linear defaults (uniform ±1/sqrt(fan_in))."""
    k1, k2, k3, k4 = jax.random.split(key, 4)
    lim1 = 1.0 / jnp.sqrt(jnp.float32(input_dim))
    lim2 = 1.0 / jnp.sqrt(jnp.float32(hidden_dim))
    w1 = jax.random.uniform(k1, (hidden_dim, input_dim), dtype, -lim1, lim1)
    b1 = jax.random.uniform(k2, (hidden_dim,), dtype, -lim1, lim1)
    w2 = jax.random.uniform(k3, (1, hidden_dim), dtype, -lim2, lim2)
    b2 = jax.random.uniform(k4, (1,), dtype, -lim2, lim2)
    return w1, b1, w2, b2


def reference_forward(x1, x2, w1, b1, w2, b2):
    combined = jnp.concatenate([x1, x2], axis=1)
    h = jnp.maximum(combined @ w1.T + b1, 0.0)
    s = h @ w2.T + b2                      # (B, 1)
    attn = jax.nn.softmax(s, axis=1)       # softmax over singleton axis -> 1.0
    return attn * combined


if __name__ == "__main__":
    key = jax.random.PRNGKey(0)
    kx1, kx2, kp = jax.random.split(key, 3)

    B = 8
    D1, D2 = 64, 64              # concat feature dim = 128 -> lane-dense output
    input_dim = D1 + D2          # 128
    hidden_dim = 128

    x1 = jax.random.normal(kx1, (B, D1), dtype=jnp.float32)
    x2 = jax.random.normal(kx2, (B, D2), dtype=jnp.float32)
    w1, b1, w2, b2 = init_params(kp, input_dim, hidden_dim)
    params = prepare_params(w1, b1, w2, b2)

    out = attention_fusion_forward(x1, x2, *params)
    out = jax.block_until_ready(out)

    ref = reference_forward(x1, x2, w1, b1, w2, b2)
    assert out.shape == (B, input_dim)
    assert jnp.allclose(out, ref, atol=1e-5, rtol=1e-5)

    print("KERNEL_OK")
</pallas_src>

<mosaic_0001>
module attributes {stable_mosaic.version = 11 : i64} {
  func.func @_attention_fusion_kernel(%arg0: i32, %arg1: memref<8x64xf32, #tpu.memory_space<vmem>>, %arg2: memref<8x64xf32, #tpu.memory_space<vmem>>, %arg3: memref<128x128xf32, #tpu.memory_space<vmem>>, %arg4: memref<1x128xf32, #tpu.memory_space<vmem>>, %arg5: memref<1x128xf32, #tpu.memory_space<vmem>>, %arg6: memref<1xf32, #tpu.memory_space<smem>>, %arg7: memref<8x128xf32, #tpu.memory_space<vmem>>) attributes {dimension_semantics = [#tpu.dimension_semantics<parallel>], iteration_bounds = array<i64: 1>, scalar_prefetch = 0 : i64, scratch_operands = 0 : i64, tpu.core_type = #tpu.core_type<tc>, window_params = [{transform_indices = @transform_0, window_bounds = array<i64: 8, 64>}, {transform_indices = @transform_1, window_bounds = array<i64: 8, 64>}, {pipeline_mode = #tpu.pipeline_mode<synchronous>, transform_indices = @transform_2, window_bounds = array<i64: 128, 128>}, {pipeline_mode = #tpu.pipeline_mode<synchronous>, transform_indices = @transform_3, window_bounds = array<i64: 1, 128>}, {pipeline_mode = #tpu.pipeline_mode<synchronous>, transform_indices = @transform_4, window_bounds = array<i64: 1, 128>}, {transform_indices = @transform_5, window_bounds = array<i64: 1>}, {transform_indices = @transform_6, window_bounds = array<i64: 8, 128>}]} {
    %c0 = arith.constant 0 : index
    %c0_0 = arith.constant 0 : index
    %0 = vector.load %arg1[%c0, %c0_0] : memref<8x64xf32, #tpu.memory_space<vmem>>, vector<8x64xf32>
    %c0_1 = arith.constant 0 : index
    %c0_2 = arith.constant 0 : index
    %1 = vector.load %arg2[%c0_1, %c0_2] : memref<8x64xf32, #tpu.memory_space<vmem>>, vector<8x64xf32>
    %2 = tpu.concatenate %0, %1 in 1 : vector<8x64xf32>, vector<8x64xf32> -> vector<8x128xf32>
    %c0_3 = arith.constant 0 : index
    %c0_4 = arith.constant 0 : index
    %3 = vector.load %arg3[%c0_3, %c0_4] : memref<128x128xf32, #tpu.memory_space<vmem>>, vector<128x128xf32>
    %cst = arith.constant dense<0.000000e+00> : vector<8x128xf32>
    %4 = tpu.matmul %2, %3, %cst {dimension_numbers = #tpu.dot_dimension_numbers<[1], [0], [0], [1], [0, 0, 1, 1], [], []>} : vector<8x128xf32>, vector<128x128xf32>, vector<8x128xf32> -> vector<8x128xf32>
    %c0_5 = arith.constant 0 : index
    %c0_6 = arith.constant 0 : index
    %5 = vector.load %arg4[%c0_5, %c0_6] : memref<1x128xf32, #tpu.memory_space<vmem>>, vector<1x128xf32>
    %6 = vector.broadcast %5 : vector<1x128xf32> to vector<8x128xf32>
    %7 = arith.addf %4, %6 : vector<8x128xf32>
    %cst_7 = arith.constant 0.000000e+00 : f32
    %8 = vector.broadcast %cst_7 : f32 to vector<8x128xf32>
    %9 = arith.maximumf %7, %8 : vector<8x128xf32>
    %c0_8 = arith.constant 0 : index
    %c0_9 = arith.constant 0 : index
    %10 = vector.load %arg5[%c0_8, %c0_9] : memref<1x128xf32, #tpu.memory_space<vmem>>, vector<1x128xf32>
    %11 = vector.broadcast %10 : vector<1x128xf32> to vector<8x128xf32>
    %12 = arith.mulf %9, %11 : vector<8x128xf32>
    %cst_10 = arith.constant dense<0.000000e+00> : vector<8xf32>
    %13 = vector.multi_reduction <add>, %12, %cst_10 [1] : vector<8x128xf32> to vector<8xf32>
    %14 = vector.shape_cast %13 : vector<8xf32> to vector<8x1xf32>
    %c0_11 = arith.constant 0 : index
    %15 = memref.load %arg6[%c0_11] : memref<1xf32, #tpu.memory_space<smem>>
    %16 = vector.broadcast %15 : f32 to vector<8x1xf32>
    %17 = arith.addf %14, %16 : vector<8x1xf32>
    %cst_12 = arith.constant dense<0xFF800000> : vector<8xf32>
    %18 = vector.multi_reduction <maximumf>, %17, %cst_12 [1] : vector<8x1xf32> to vector<8xf32>
    %19 = vector.shape_cast %18 : vector<8xf32> to vector<8x1xf32>
    %20 = arith.subf %17, %19 : vector<8x1xf32>
    %21 = math.exp %20 : vector<8x1xf32>
    %cst_13 = arith.constant dense<0.000000e+00> : vector<8xf32>
    %22 = vector.multi_reduction <add>, %21, %cst_13 [1] : vector<8x1xf32> to vector<8xf32>
    %23 = vector.shape_cast %22 : vector<8xf32> to vector<8x1xf32>
    %24 = tpu.reciprocal %23 : vector<8x1xf32> -> vector<8x1xf32>
    %25 = arith.mulf %21, %24 : vector<8x1xf32>
    %26 = vector.broadcast %25 : vector<8x1xf32> to vector<8x128xf32>
    %27 = arith.mulf %26, %2 : vector<8x128xf32>
    %c0_14 = arith.constant 0 : index
    %c0_15 = arith.constant 0 : index
    %28 = vector.load %arg7[%c0_14, %c0_15] : memref<8x128xf32, #tpu.memory_space<vmem>>, vector<8x128xf32>
    tpu.vector_store %arg7[%c0_14, %c0_15], %27 {strides = array<i32>} : memref<8x128xf32, #tpu.memory_space<vmem>>, vector<8x128xf32>,
    return
  }
  func.func @transform_0(%arg0: i32) -> (i32, i32) {
    %c0_i32 = arith.constant 0 : i32
    %c0_i32_0 = arith.constant 0 : i32
    return %arg0, %c0_i32 : i32, i32
  }
  func.func @transform_1(%arg0: i32) -> (i32, i32) {
    %c0_i32 = arith.constant 0 : i32
    %c0_i32_0 = arith.constant 0 : i32
    return %arg0, %c0_i32 : i32, i32
  }
  func.func @transform_2(%arg0: i32) -> (i32, i32) {
    %c0_i32 = arith.constant 0 : i32
    %c0_i32_0 = arith.constant 0 : i32
    %c0_i32_1 = arith.constant 0 : i32
    return %c0_i32, %c0_i32_0 : i32, i32
  }
  func.func @transform_3(%arg0: i32) -> (i32, i32) {
    %c0_i32 = arith.constant 0 : i32
    %c0_i32_0 = arith.constant 0 : i32
    %c0_i32_1 = arith.constant 0 : i32
    return %c0_i32, %c0_i32_0 : i32, i32
  }
  func.func @transform_4(%arg0: i32) -> (i32, i32) {
    %c0_i32 = arith.constant 0 : i32
    %c0_i32_0 = arith.constant 0 : i32
    %c0_i32_1 = arith.constant 0 : i32
    return %c0_i32, %c0_i32_0 : i32, i32
  }
  func.func @transform_5(%arg0: i32) -> i32 {
    %c0_i32 = arith.constant 0 : i32
    %c0_i32_0 = arith.constant 0 : i32
    return %c0_i32 : i32
  }
  func.func @transform_6(%arg0: i32) -> (i32, i32) {
    %c0_i32 = arith.constant 0 : i32
    %c0_i32_0 = arith.constant 0 : i32
    return %arg0, %c0_i32 : i32, i32
  }
}

</mosaic_0001>

<llo_original>
// kernel: tpu_custom_call.1
$region0: #{tpu_custom_call.1}
  #allocation0 [shape = 'u32[]', space=smem, size = 0x4, offset = 0x4, fixed_abs, tag = 'smem constant byte address 0x4 - core index']
  #allocation1 [shape = 'u32[144,128]{1,0:T(1,128)}', space=vmem, size = 0x12000, scoped, tag = 'internal scratch']
  #allocation2 [shape = 'f32[1]{0:T(128)S(6)}', space=smem, size = 0x200, scoped, tag = 'scoped memory for tpu_custom_call.1']
  %s0 = inlined_call_operand.hbm [shape: f32[8,64], index: 0, kind: input, shape index: {}]
  %s1 = inlined_call_operand.hbm [shape: f32[8,64], index: 1, kind: input, shape index: {}]
  %s2 = inlined_call_operand.hbm [shape: f32[128,128], index: 2, kind: input, shape index: {}]
  %s3 = inlined_call_operand.vmem [shape: f32[1,128], index: 3, kind: input, shape index: {}]
  %s4 = inlined_call_operand.vmem [shape: f32[1,128], index: 4, kind: input, shape index: {}]
  %s5 = inlined_call_operand.<no memory space> [shape: f32[1], index: 5, kind: input, shape index: {}]
  %s6 = inlined_call_operand.hbm [shape: f32[8,128], index: 6, kind: output, shape index: {}]
  %s7 = sld [smem:[#allocation0]]
  $region46: #{tpu_custom_call.1} parent=0
    _
  %s9 = ssub.s32 1, %s7
  %s10 = scalar_select 0, %s9, %s7
  %11 = sst [smem:[#allocation2]] %s5
  $region1: #{tpu_custom_call.1} parent=0
    #allocation3 [shape = 'u8[4096]{0}', space=vmem, size = 0x1000, scoped, tag = 'input window, operand 0, single buffered']
    #allocation4 [shape = 's32[1]{0}', space=sflag, size = 0x4, scoped, tag = 'scoped memory for tpu_custom_call.1']
    #allocation5 [shape = 's32[1]{0}', space=sflag, size = 0x4, scoped, tag = 'scoped memory for tpu_custom_call.1']
    #allocation6 [shape = 'u8[4096]{0}', space=vmem, size = 0x1000, scoped, tag = 'input window, operand 1, single buffered']
    #allocation7 [shape = 's32[1]{0}', space=sflag, size = 0x4, scoped, tag = 'scoped memory for tpu_custom_call.1']
    #allocation8 [shape = 'u8[65536]{0}', space=vmem, size = 0x10000, scoped, tag = 'input window, operand 2, single buffered']
    #allocation9 [shape = 'u8[4096]{0}', space=vmem, size = 0x1000, scoped, tag = 'output window, operand 0, single buffered']
    %12 = vsyncpa [#allocation4], 0
    %13 = vsyncpa [#allocation7], 0
    %14 = vsyncpa [#allocation5], 0
    // Predicated region
    $region2: #{tpu_custom_call.1} parent=1 // pred_check
      _
    $region3: #{tpu_custom_call.1} parent=1 // pred_check_branch
      %16 = sbr.rel (0) target = $region5
    $region4: #{tpu_custom_call.1} parent=1 // pred_region
      %s18 = ssub.s32 128, 128
      %19 = vsyncadd [#allocation4], %s18
      %s21 = sshll.u32 [#allocation3], 4
      %s22 = int_to_ptr.vmem [resolvable:$true] %s21
      %24 = dma.hbm_to_vmem [thread:$0]  %s0, 128, %s22, [#allocation4]
    $region5: #{tpu_custom_call.1} parent=1 // pred_fallthru
      _
    // Predicated region
    $region6: #{tpu_custom_call.1} parent=1 // pred_check
      _
    $region7: #{tpu_custom_call.1} parent=1 // pred_check_branch
      %26 = sbr.rel (0) target = $region9
    $region8: #{tpu_custom_call.1} parent=1 // pred_region
      %s28 = ssub.s32 128, 128
      %29 = vsyncadd [#allocation7], %s28
      %s31 = sshll.u32 [#allocation6], 4
      %s32 = int_to_ptr.vmem [resolvable:$true] %s31
      %34 = dma.hbm_to_vmem [thread:$0]  %s1, 128, %s32, [#allocation7]
    $region9: #{tpu_custom_call.1} parent=1 // pred_fallthru
      _
    // Predicated region
    $region10: #{tpu_custom_call.1} parent=1 // pred_check
      _
    $region11: #{tpu_custom_call.1} parent=1 // pred_check_branch
      %36 = sbr.rel (0) target = $region13
    $region12: #{tpu_custom_call.1} parent=1 // pred_region
      %s38 = ssub.s32 2048, 2048
      %39 = vsyncadd [#allocation7], %s38
      %s40 = sshll.u32 [#allocation8], 4
      %s41 = int_to_ptr.vmem [resolvable:$true] %s40
      %46 = dma.hbm_to_vmem [thread:$0]  %s2, 2048, %s41, [#allocation7], 128, 128, 8
    $region13: #{tpu_custom_call.1} parent=1 // pred_fallthru
      _
    // Predicated region
    $region14: #{tpu_custom_call.1} parent=1 // pred_check
      _
    $region15: #{tpu_custom_call.1} parent=1 // pred_check_branch
      %48 = sbr.rel (0) target = $region17
    $region16: #{tpu_custom_call.1} parent=1 // pred_region
      _
    $region17: #{tpu_custom_call.1} parent=1 // pred_fallthru
      _
    // Predicated region
    $region18: #{tpu_custom_call.1} parent=1 // pred_check
      _
    $region19: #{tpu_custom_call.1} parent=1 // pred_check_branch
      %50 = sbr.rel (0) target = $region21
    $region20: #{tpu_custom_call.1} parent=1 // pred_region
      _
    $region21: #{tpu_custom_call.1} parent=1 // pred_fallthru
      _
    // Predicated region
    $region22: #{tpu_custom_call.1} parent=1 // pred_check
      _
    $region23: #{tpu_custom_call.1} parent=1 // pred_check_branch
      %52 = sbr.rel (0) target = $region25
    $region24: #{tpu_custom_call.1} parent=1 // pred_region
      _
    $region25: #{tpu_custom_call.1} parent=1 // pred_fallthru
      _
    // Predicated region
    $region26: #{tpu_custom_call.1} parent=1 // pred_check
      _
    $region27: #{tpu_custom_call.1} parent=1 // pred_check_branch
      %54 = sbr.rel (0) target = $region29
    $region28: #{tpu_custom_call.1} parent=1 // pred_region
      %55 = dma.done [#allocation4], 128
    $region29: #{tpu_custom_call.1} parent=1 // pred_fallthru
      _
    // Predicated region
    $region30: #{tpu_custom_call.1} parent=1 // pred_check
      _
    $region31: #{tpu_custom_call.1} parent=1 // pred_check_branch
      %57 = sbr.rel (0) target = $region33
    $region32: #{tpu_custom_call.1} parent=1 // pred_region
      %58 = dma.done [#allocation7], 128
    $region33: #{tpu_custom_call.1} parent=1 // pred_fallthru
      _
    // Predicated region
    $region34: #{tpu_custom_call.1} parent=1 // pred_check
      _
    $region35: #{tpu_custom_call.1} parent=1 // pred_check_branch
      %60 = sbr.rel (0) target = $region37
    $region36: #{tpu_custom_call.1} parent=1 // pred_region
      %61 = dma.done [#allocation7], 2048
    $region37: #{tpu_custom_call.1} parent=1 // pred_fallthru
      _
    %v62 = vld [vmem:[#allocation3] sm:$0xff]
    %v63 = vld [vmem:[#allocation6] sm:$0xff]
    %65 = vrot.lane.b32.xlu0 %v63, 64
    %v66 = vpop.permute.xlu0 %65
    %vm68 = vcmask 523264
    %v69 = vsel %vm68, %v62, %v66
    %v70 = vld [vmem:[#allocation8] sm:$0xff]
    %v71 = vld [vmem:[#allocation8 + $0x8] sm:$0xff]
    %v72 = vld [vmem:[#allocation8 + $0x10] sm:$0xff]
    %v73 = vld [vmem:[#allocation8 + $0x18] sm:$0xff]
    %v74 = vld [vmem:[#allocation8 + $0x20] sm:$0xff]
    %v75 = vld [vmem:[#allocation8 + $0x28] sm:$0xff]
    %v76 = vld [vmem:[#allocation8 + $0x30] sm:$0xff]
    %v77 = vld [vmem:[#allocation8 + $0x38] sm:$0xff]
    %v78 = vld [vmem:[#allocation8 + $0x40] sm:$0xff]
    %v79 = vld [vmem:[#allocation8 + $0x48] sm:$0xff]
    %v80 = vld [vmem:[#allocation8 + $0x50] sm:$0xff]
    %v81 = vld [vmem:[#allocation8 + $0x58] sm:$0xff]
    %v82 = vld [vmem:[#allocation8 + $0x60] sm:$0xff]
    %v83 = vld [vmem:[#allocation8 + $0x68] sm:$0xff]
    %v84 = vld [vmem:[#allocation8 + $0x70] sm:$0xff]
    %v85 = vld [vmem:[#allocation8 + $0x78] sm:$0xff]
    %v86 = vld [vmem:[%s3] sm:$0x1]
    %v88 = vlaneseq
    %v89 = vshrl.u32 %v88, 7
    %v90 = vsub.s32 0, %v89
    %v91 = vrot.slane %v86, %v90
    %93 = vmatprep.subr.mxu0 0.0
    %94 = vmatpush1.msra.mxu0 %v70
    %95 = vmatprep.subr.mxu0 0.0
    %96 = vmatpush1.msra.mxu0 %v71
    %97 = vmatprep.subr.mxu0 0.0
    %98 = vmatpush1.msra.mxu0 %v72
    %99 = vmatprep.subr.mxu0 0.0
    %100 = vmatpush1.msra.mxu0 %v73
    %101 = vmatprep.subr.mxu0 0.0
    %102 = vmatpush1.msra.mxu0 %v74
    %103 = vmatprep.subr.mxu0 0.0
    %104 = vmatpush1.msra.mxu0 %v75
    %105 = vmatprep.subr.mxu0 0.0
    %106 = vmatpush1.msra.mxu0 %v76
    %107 = vmatprep.subr.mxu0 0.0
    %108 = vmatpush1.msra.mxu0 %v77
    %109 = vmatprep.subr.mxu0 0.0
    %110 = vmatpush1.msra.mxu0 %v78
    %111 = vmatprep.subr.mxu0 0.0
    %112 = vmatpush1.msra.mxu0 %v79
    %113 = vmatprep.subr.mxu0 0.0
    %114 = vmatpush1.msra.mxu0 %v80
    %115 = vmatprep.subr.mxu0 0.0
    %116 = vmatpush1.msra.mxu0 %v81
    %117 = vmatprep.subr.mxu0 0.0
    %118 = vmatpush1.msra.mxu0 %v82
    %119 = vmatprep.subr.mxu0 0.0
    %120 = vmatpush1.msra.mxu0 %v83
    %121 = vmatprep.subr.mxu0 0.0
    %122 = vmatpush1.msra.mxu0 %v84
    %123 = vmatprep.subr.mxu0 0.0
    %124 = vmatpush1.msra.mxu0 %v85
    %125 = vmatprep.subr.mxu0 0.0
    %126 = vmatpush1.msra.mxu0 0.0
    %127 = vmatprep.subr.mxu0 0.0
    %128 = vmatpush1.msra.mxu0 0.0
    %129 = vmatprep.subr.mxu0 0.0
    %130 = vmatpush1.msra.mxu0 0.0
    %131 = vmatprep.subr.mxu0 0.0
    %132 = vmatpush1.msra.mxu0 0.0
    %133 = vmatprep.subr.mxu0 0.0
    %134 = vmatpush1.msra.mxu0 0.0
    %135 = vmatprep.subr.mxu0 0.0
    %136 = vmatpush1.msra.mxu0 0.0
    %137 = vmatprep.subr.mxu0 0.0
    %138 = vmatpush1.msra.mxu0 0.0
    %139 = vmatprep.subr.mxu0 0.0
    %140 = vmatpush1.msra.mxu0 0.0
    %141 = vmatprep.subr.mxu0 0.0
    %142 = vmatpush1.msra.mxu0 0.0
    %143 = vmatprep.subr.mxu0 0.0
    %144 = vmatpush1.msra.mxu0 0.0
    %145 = vmatprep.subr.mxu0 0.0
    %146 = vmatpush1.msra.mxu0 0.0
    %147 = vmatprep.subr.mxu0 0.0
    %148 = vmatpush1.msra.mxu0 0.0
    %149 = vmatprep.subr.mxu0 0.0
    %150 = vmatpush1.msra.mxu0 0.0
    %151 = vmatprep.subr.mxu0 0.0
    %152 = vmatpush1.msra.mxu0 0.0
    %153 = vmatprep.subr.mxu0 0.0
    %154 = vmatpush1.msra.mxu0 0.0
    %155 = vmatprep.subr.mxu0 0.0
    %156 = vmatpush1.msra.mxu0 0.0
    %157 = vmatprep.mubr.f32.mxu0 0.0
    %158 = vmatmul.mubr.f32.gmra.mrb[0].mxu0 %v69
    %v159 = vpop.f32.mrb[0].mxu0
    %v160 = vadd.f32 %v91, %v159
    %v161 = vpop.f32.mrb[0].mxu0
    %162 = vdwg.mxu0
    %v163 = vmax.f32 %v160, 0.0
    %v164 = vld [vmem:[%s4] sm:$0x1]
    %v166 = vlaneseq
    %v167 = vshrl.u32 %v166, 7
    %v168 = vsub.s32 0, %v167
    %v169 = vrot.slane %v164, %v168
    %v171 = vmul.f32 %v163, %v169
    %172 = vadd.xlane.f32.xlu0 %v171
    %v173 = vpop.xlane.xlu0 %172
    %s174 = sld [smem:[#allocation2]]
    %v175 = vstv %s174
    %v176 = vadd.f32 %v173, %v175
    %v177 = vsub.f32 %v176, %v176
    %v178 = vmul.f32 %v177, 1.442695
    %v179 = vpow.pop %v178
    %v180 = vadd.f32 %v179, 0.0
    %v181 = vrcp.pop %v180
    %v182 = vmul.f32 %v179, %v181
    %v183 = vmul.f32 %v182, %v69
    %184 = vst [vmem:[#allocation9] sm:$0xff] %v183
    // Predicated region
    $region38: #{tpu_custom_call.1} parent=1 // pred_check
      _
    $region39: #{tpu_custom_call.1} parent=1 // pred_check_branch
      %186 = sbr.rel (0) target = $region41
    $region40: #{tpu_custom_call.1} parent=1 // pred_region
      %s188 = ssub.s32 128, 128
      %189 = vsyncadd [#allocation5], %s188
      %s191 = sshll.u32 [#allocation9], 4
      %s192 = int_to_ptr.vmem [resolvable:$true] %s191
      %194 = dma.vmem_to_hbm [thread:$0]  %s192, 128, %s6, [#allocation5]
    $region41: #{tpu_custom_call.1} parent=1 // pred_fallthru
      _
    // Predicated region
    $region42: #{tpu_custom_call.1} parent=1 // pred_check
      _
    $region43: #{tpu_custom_call.1} parent=1 // pred_check_branch
      %196 = sbr.rel (0) target = $region45
    $region44: #{tpu_custom_call.1} parent=1 // pred_region
      %197 = dma.done [#allocation5], 128
    $region45: #{tpu_custom_call.1} parent=1 // pred_fallthru
      _
    %198 = vsyncpa [#allocation4], 1
    %199 = vsyncpa [#allocation7], 1
    %200 = vsyncpa [#allocation5], 1

</llo_original>
